<compile_context>
chip_gen: v7x
topology: tpu7x:2x2x1
jax: 0.10.0
libtpu: 0.0.40
codegen_flags: <defaults>
</compile_context>

<pallas_src>
import jax
import jax.numpy as jnp
from jax.experimental import pallas as pl
from jax.experimental.pallas import tpu as pltpu

_EPS = 1e-5
_SMALL_ROWS = 8   # packed small-param rows appended after w1 / w2 in the slab


def _mlp_population_kernel(x_ref, slab_ref, o_ref):
    """One grid step = one population member.  x is shared across members."""
    B, D = x_ref.shape
    x = x_ref[...]                           # (B, D)   compute dtype (bf16/f32)
    slab = slab_ref[...]                     # (D+24, 16) f32 packed parameters

    w1 = slab[0:D, :].astype(x.dtype)        # fc1 weight, `2x-1` already folded
    w2 = slab[D:D + 16, :].astype(x.dtype)   # fc2 weight
    b1 = slab[D + 16:D + 17, :]              # (1,16) fc1 bias (fold included)
    b2 = slab[D + 17:D + 18, :]              # (1,16) fc2 bias
    gamma = slab[D + 18:D + 19, :]           # (1,16) BN weight
    beta = slab[D + 19:D + 20, :]            # (1,16) BN bias
    wo = slab[D + 20:D + 21, :]              # (1,16) output weight row (16->1)
    bo = slab[D + 21:D + 22, 0:1]            # (1,1)  output bias

    # fc1 + relu, fc2 + relu (MXU, f32 accumulation).
    h1 = jnp.maximum(
        jnp.dot(x, w1, preferred_element_type=jnp.float32) + b1, 0.0)
    h2 = jnp.maximum(
        jnp.dot(h1.astype(w2.dtype), w2,
                preferred_element_type=jnp.float32) + b2, 0.0)

    # BatchNorm1d (training mode: batch mean, biased batch variance), with the
    # affine transform folded into the final 16 -> 1 projection.
    mean = jnp.mean(h2, axis=0, keepdims=True)                        # (1, 16)
    diff = h2 - mean
    var = jnp.mean(diff * diff, axis=0, keepdims=True)                # (1, 16)
    scale = gamma * jax.lax.rsqrt(var + _EPS)                         # (1, 16)
    wv = scale * wo                                                   # (1, 16)
    bias = jnp.sum((beta - mean * scale) * wo, axis=-1, keepdims=True) + bo

    # logits^T: contract the 16 features of h2 against wv -> (1, B); batch on
    # the lane axis so the store is lane-dense (no 1-lane masked column).
    logits = jax.lax.dot_general(
        wv, h2, dimension_numbers=(((1,), (1,)), ((), ())),
        preferred_element_type=jnp.float32) + bias                    # (1, B)

    o_ref[...] = jax.nn.sigmoid(logits)


def mlp_population_forward(x, slabs, *, compute_dtype=jnp.bfloat16):
    """Evaluate all P population members on the shared batch with ONE pallas_call.

    x:     (B, D)       f32 input batch (shared by every member)
    slabs: (P, D+24, 16) f32 packed parameters (see fold_member)
    returns (P, B, 1)   f32 sigmoid outputs, matching the nn.Module per member
    """
    B, D = x.shape
    P, rows, feat = slabs.shape
    assert rows == D + 16 + _SMALL_ROWS and feat == 16

    x_in = x.astype(compute_dtype)

    out = pl.pallas_call(
        _mlp_population_kernel,
        out_shape=jax.ShapeDtypeStruct((P, 1, B), jnp.float32),
        grid=(P,),
        in_specs=[
            # Shared input batch: same block every grid step (stays resident).
            pl.BlockSpec((B, D), lambda p: (0, 0)),
            # One member's packed parameter slab per grid step.
            pl.BlockSpec((pl.Squeezed(), rows, 16), lambda p: (p, 0, 0)),
        ],
        out_specs=pl.BlockSpec((pl.Squeezed(), 1, B), lambda p: (p, 0, 0)),
        compiler_params=pltpu.CompilerParams(
            # Each member's BN stats live fully inside its own grid step, so
            # sharding the population axis across v7x's two cores is safe.
            dimension_semantics=("parallel",),
        ),
    )(x_in, slabs)

    # Layout plumbing only: present the module's (B, 1) output per member.
    return jnp.transpose(out, (0, 2, 1))


def mlp_forward(x, slab, *, compute_dtype=jnp.bfloat16):
    """Single-member convenience wrapper (original nn.Module call signature)."""
    return mlp_population_forward(x, slab[None], compute_dtype=compute_dtype)[0]


def make_params(key, max_model_size):
    """PyTorch-equivalent parameters; linear weights stored as [in, out]."""
    k1, k2, k3, k4, k5, k6 = jax.random.split(key, 6)
    bound1 = 1.0 / jnp.sqrt(float(max_model_size))
    bound2 = 1.0 / jnp.sqrt(16.0)
    return dict(
        w1=jax.random.uniform(k1, (max_model_size, 16), jnp.float32, -bound1, bound1),
        b1=jax.random.uniform(k2, (16,), jnp.float32, -bound1, bound1),
        w2=jax.random.uniform(k3, (16, 16), jnp.float32, -bound2, bound2),
        b2=jax.random.uniform(k4, (16,), jnp.float32, -bound2, bound2),
        gamma=jnp.ones((16,), jnp.float32),
        beta=jnp.zeros((16,), jnp.float32),
        wo=jax.random.uniform(k5, (16, 1), jnp.float32, -bound2, bound2),
        bo=jax.random.uniform(k6, (1,), jnp.float32, -bound2, bound2),
    )


def fold_member(p):
    """One-time folding of a member's params into a single (D+24, 16) f32 slab.

    Rows: [0:D]   = 2 * w1                (folds `x = 2*x - 1` scale)
          [D:D+16]= w2
          D+16    = b1 - colsum(w1)       (folds `x = 2*x - 1` shift)
          D+17    = b2
          D+18/19 = gamma / beta
          D+20    = wo (as a row)
          D+21    = bo (broadcast);  D+22, D+23 = padding (8-row alignment)
    """
    D = p["w1"].shape[0]
    slab = jnp.zeros((D + 16 + _SMALL_ROWS, 16), jnp.float32)
    slab = slab.at[0:D, :].set(2.0 * p["w1"])
    slab = slab.at[D:D + 16, :].set(p["w2"])
    slab = slab.at[D + 16].set(p["b1"] - jnp.sum(p["w1"], axis=0))
    slab = slab.at[D + 17].set(p["b2"])
    slab = slab.at[D + 18].set(p["gamma"])
    slab = slab.at[D + 19].set(p["beta"])
    slab = slab.at[D + 20].set(p["wo"][:, 0])
    slab = slab.at[D + 21].set(jnp.full((16,), p["bo"][0], jnp.float32))
    return slab


def reference_forward(x, p):
    """Pure-JAX reference matching the PyTorch module (training-mode BN)."""
    x = 2.0 * x - 1.0
    h1 = jnp.maximum(x @ p["w1"] + p["b1"], 0.0)
    h2 = jnp.maximum(h1 @ p["w2"] + p["b2"], 0.0)
    mean = jnp.mean(h2, axis=0, keepdims=True)
    var = jnp.mean((h2 - mean) ** 2, axis=0, keepdims=True)
    bn = p["gamma"] * (h2 - mean) * jax.lax.rsqrt(var + _EPS) + p["beta"]
    return jax.nn.sigmoid(bn @ p["wo"] + p["bo"])


if __name__ == "__main__":
    key = jax.random.PRNGKey(0)
    kx, kp = jax.random.split(key)

    max_model_size = 32   # D
    batch = 8             # B
    population = 4        # P

    x = jax.random.uniform(kx, (batch, max_model_size), jnp.float32)
    member_keys = jax.random.split(kp, population)
    members = [make_params(k, max_model_size) for k in member_keys]
    slabs = jnp.stack([fold_member(m) for m in members])     # (P, D+24, 16)

    # bf16-fed MXU path (production setting per perf review).
    out_bf16 = mlp_population_forward(x, slabs, compute_dtype=jnp.bfloat16)
    jax.block_until_ready(out_bf16)
    # f32 path: proves the 2x-1 / BN-affine folds are numerically exact.
    out_f32 = mlp_population_forward(x, slabs, compute_dtype=jnp.float32)
    jax.block_until_ready(out_f32)

    assert out_bf16.shape == (population, batch, 1)
    assert out_f32.shape == (population, batch, 1)

    ref = jnp.stack([reference_forward(x, m) for m in members])  # (P, B, 1)
    assert jnp.allclose(out_f32, ref, atol=2e-5, rtol=2e-5), (out_f32, ref)
    # bf16 inputs to the MXU (f32 accumulation): looser, bandwidth-motivated.
    assert jnp.allclose(out_bf16, ref, atol=2e-2, rtol=2e-2), (out_bf16, ref)

    # Single-member wrapper sanity check (original module call shape).
    single = mlp_forward(x, slabs[0], compute_dtype=jnp.float32)
    jax.block_until_ready(single)
    assert single.shape == (batch, 1)
    assert jnp.allclose(single, ref[0], atol=2e-5, rtol=2e-5)

    print("KERNEL_OK")
</pallas_src>

<mosaic_0001>
module attributes {stable_mosaic.version = 11 : i64} {
  func.func @_mlp_population_kernel(%arg0: i32, %arg1: memref<8x32xbf16, #tpu.memory_space<vmem>>, %arg2: memref<1x56x16xf32, #tpu.memory_space<vmem>>, %arg3: memref<1x1x8xf32, #tpu.memory_space<vmem>>) attributes {dimension_semantics = [#tpu.dimension_semantics<parallel>], iteration_bounds = array<i64: 4>, scalar_prefetch = 0 : i64, scratch_operands = 0 : i64, tpu.core_type = #tpu.core_type<tc>, window_params = [{pipeline_mode = #tpu.pipeline_mode<synchronous>, transform_indices = @transform_0, window_bounds = array<i64: 8, 32>}, {transform_indices = @transform_1, window_bounds = array<i64: 1, 56, 16>}, {transform_indices = @transform_2, window_bounds = array<i64: 1, 1, 8>}]} {
    %c0 = arith.constant 0 : index
    %c0_0 = arith.constant 0 : index
    %0 = vector.load %arg1[%c0, %c0_0] : memref<8x32xbf16, #tpu.memory_space<vmem>>, vector<8x32xbf16>
    %c0_1 = arith.constant 0 : index
    %c0_2 = arith.constant 0 : index
    %c0_3 = arith.constant 0 : index
    %1 = vector.load %arg2[%c0_1, %c0_2, %c0_3] : memref<1x56x16xf32, #tpu.memory_space<vmem>>, vector<1x56x16xf32>
    %2 = vector.shape_cast %1 : vector<1x56x16xf32> to vector<56x16xf32>
    %3 = vector.extract_strided_slice %2 {offsets = [0, 0], sizes = [32, 16], strides = [1, 1]} : vector<56x16xf32> to vector<32x16xf32>
    %4 = arith.truncf %3 : vector<32x16xf32> to vector<32x16xbf16>
    %5 = vector.extract_strided_slice %2 {offsets = [32, 0], sizes = [16, 16], strides = [1, 1]} : vector<56x16xf32> to vector<16x16xf32>
    %6 = arith.truncf %5 : vector<16x16xf32> to vector<16x16xbf16>
    %7 = vector.extract_strided_slice %2 {offsets = [48, 0], sizes = [1, 16], strides = [1, 1]} : vector<56x16xf32> to vector<1x16xf32>
    %8 = vector.extract_strided_slice %2 {offsets = [49, 0], sizes = [1, 16], strides = [1, 1]} : vector<56x16xf32> to vector<1x16xf32>
    %9 = vector.extract_strided_slice %2 {offsets = [50, 0], sizes = [1, 16], strides = [1, 1]} : vector<56x16xf32> to vector<1x16xf32>
    %10 = vector.extract_strided_slice %2 {offsets = [51, 0], sizes = [1, 16], strides = [1, 1]} : vector<56x16xf32> to vector<1x16xf32>
    %11 = vector.extract_strided_slice %2 {offsets = [52, 0], sizes = [1, 16], strides = [1, 1]} : vector<56x16xf32> to vector<1x16xf32>
    %12 = vector.extract_strided_slice %2 {offsets = [53, 0], sizes = [1, 1], strides = [1, 1]} : vector<56x16xf32> to vector<1x1xf32>
    %cst = arith.constant dense<0.000000e+00> : vector<8x16xf32>
    %13 = tpu.matmul %0, %4, %cst {dimension_numbers = #tpu.dot_dimension_numbers<[1], [0], [0], [1], [0, 0, 1, 1], [], []>} : vector<8x32xbf16>, vector<32x16xbf16>, vector<8x16xf32> -> vector<8x16xf32>
    %14 = vector.broadcast %7 : vector<1x16xf32> to vector<8x16xf32>
    %15 = arith.addf %13, %14 : vector<8x16xf32>
    %cst_4 = arith.constant 0.000000e+00 : f32
    %16 = vector.broadcast %cst_4 : f32 to vector<8x16xf32>
    %17 = arith.maximumf %15, %16 : vector<8x16xf32>
    %18 = arith.truncf %17 : vector<8x16xf32> to vector<8x16xbf16>
    %cst_5 = arith.constant dense<0.000000e+00> : vector<8x16xf32>
    %19 = tpu.matmul %18, %6, %cst_5 {dimension_numbers = #tpu.dot_dimension_numbers<[1], [0], [0], [1], [0, 0, 1, 1], [], []>} : vector<8x16xbf16>, vector<16x16xbf16>, vector<8x16xf32> -> vector<8x16xf32>
    %20 = vector.broadcast %8 : vector<1x16xf32> to vector<8x16xf32>
    %21 = arith.addf %19, %20 : vector<8x16xf32>
    %cst_6 = arith.constant 0.000000e+00 : f32
    %22 = vector.broadcast %cst_6 : f32 to vector<8x16xf32>
    %23 = arith.maximumf %21, %22 : vector<8x16xf32>
    %cst_7 = arith.constant dense<0.000000e+00> : vector<16xf32>
    %24 = vector.multi_reduction <add>, %23, %cst_7 [0] : vector<8x16xf32> to vector<16xf32>
    %25 = vector.shape_cast %24 : vector<16xf32> to vector<1x16xf32>
    %cst_8 = arith.constant 8.000000e+00 : f32
    %26 = vector.broadcast %cst_8 : f32 to vector<1x16xf32>
    %27 = arith.divf %25, %26 : vector<1x16xf32>
    %28 = vector.broadcast %27 : vector<1x16xf32> to vector<8x16xf32>
    %29 = arith.subf %23, %28 : vector<8x16xf32>
    %30 = arith.mulf %29, %29 : vector<8x16xf32>
    %cst_9 = arith.constant dense<0.000000e+00> : vector<16xf32>
    %31 = vector.multi_reduction <add>, %30, %cst_9 [0] : vector<8x16xf32> to vector<16xf32>
    %32 = vector.shape_cast %31 : vector<16xf32> to vector<1x16xf32>
    %cst_10 = arith.constant 8.000000e+00 : f32
    %33 = vector.broadcast %cst_10 : f32 to vector<1x16xf32>
    %34 = arith.divf %32, %33 : vector<1x16xf32>
    %cst_11 = arith.constant 9.99999974E-6 : f32
    %35 = vector.broadcast %cst_11 : f32 to vector<1x16xf32>
    %36 = arith.addf %34, %35 : vector<1x16xf32>
    %37 = math.rsqrt %36 : vector<1x16xf32>
    %38 = arith.mulf %9, %37 : vector<1x16xf32>
    %39 = arith.mulf %38, %11 : vector<1x16xf32>
    %40 = arith.mulf %27, %38 : vector<1x16xf32>
    %41 = arith.subf %10, %40 : vector<1x16xf32>
    %42 = arith.mulf %41, %11 : vector<1x16xf32>
    %cst_12 = arith.constant dense<0.000000e+00> : vector<1xf32>
    %43 = vector.multi_reduction <add>, %42, %cst_12 [1] : vector<1x16xf32> to vector<1xf32>
    %44 = vector.shape_cast %43 : vector<1xf32> to vector<1x1xf32>
    %45 = arith.addf %44, %12 : vector<1x1xf32>
    %cst_13 = arith.constant dense<0.000000e+00> : vector<1x8xf32>
    %46 = tpu.matmul %39, %23, %cst_13 {dimension_numbers = #tpu.dot_dimension_numbers<[1], [1], [0], [0], [0, 0, 1, 0], [], []>} : vector<1x16xf32>, vector<8x16xf32>, vector<1x8xf32> -> vector<1x8xf32>
    %47 = vector.broadcast %45 : vector<1x1xf32> to vector<1x8xf32>
    %48 = arith.addf %46, %47 : vector<1x8xf32>
    %49 = arith.negf %48 : vector<1x8xf32>
    %50 = math.exp %49 : vector<1x8xf32>
    %cst_14 = arith.constant 1.000000e+00 : f32
    %51 = vector.broadcast %cst_14 : f32 to vector<1x8xf32>
    %52 = arith.addf %51, %50 : vector<1x8xf32>
    %53 = arith.divf %51, %52 : vector<1x8xf32>
    %c0_15 = arith.constant 0 : index
    %c0_16 = arith.constant 0 : index
    %c0_17 = arith.constant 0 : index
    %54 = vector.load %arg3[%c0_15, %c0_16, %c0_17] : memref<1x1x8xf32, #tpu.memory_space<vmem>>, vector<1x1x8xf32>
    %55 = vector.shape_cast %54 : vector<1x1x8xf32> to vector<1x8xf32>
    %56 = vector.shape_cast %53 : vector<1x8xf32> to vector<1x1x8xf32>
    tpu.vector_store %arg3[%c0_15, %c0_16, %c0_17], %56 {strides = array<i32>} : memref<1x1x8xf32, #tpu.memory_space<vmem>>, vector<1x1x8xf32>,
    return
  }
  func.func @transform_0(%arg0: i32) -> (i32, i32) {
    %c0_i32 = arith.constant 0 : i32
    %c0_i32_0 = arith.constant 0 : i32
    %c0_i32_1 = arith.constant 0 : i32
    return %c0_i32, %c0_i32_0 : i32, i32
  }
  func.func @transform_1(%arg0: i32) -> (i32, i32, i32) {
    %c0_i32 = arith.constant 0 : i32
    %c0_i32_0 = arith.constant 0 : i32
    %c0_i32_1 = arith.constant 0 : i32
    return %arg0, %c0_i32, %c0_i32_0 : i32, i32, i32
  }
  func.func @transform_2(%arg0: i32) -> (i32, i32, i32) {
    %c0_i32 = arith.constant 0 : i32
    %c0_i32_0 = arith.constant 0 : i32
    %c0_i32_1 = arith.constant 0 : i32
    return %arg0, %c0_i32, %c0_i32_0 : i32, i32, i32
  }
}

</mosaic_0001>

<llo_original>
// kernel: tpu_custom_call.1
$region0: #{tpu_custom_call.1}
  #allocation0 [shape = 'u32[]', space=smem, size = 0x4, offset = 0x4, fixed_abs, tag = 'smem constant byte address 0x4 - core index']
  #allocation1 [shape = 'u32[144,128]{1,0:T(1,128)}', space=vmem, size = 0x12000, scoped, tag = 'internal scratch']
  %s0 = inlined_call_operand.vmem [shape: bf16[8,32], index: 0, kind: input, shape index: {}]
  %s1 = inlined_call_operand.vmem [shape: f32[4,56,16], index: 1, kind: input, shape index: {}]
  %s2 = inlined_call_operand.hbm [shape: f32[4,1,8], index: 2, kind: output, shape index: {}]
  %s3 = sld [smem:[#allocation0]]
  $region41: #{tpu_custom_call.1} parent=0
    _
  %s5 = ssub.s32 1, %s3
  %s6 = scalar_select 0, %s5, %s3
  $region1: #{tpu_custom_call.1} parent=0
    #allocation2 [shape = 'u8[1024]{0}', space=vmem, size = 0x400, scoped, tag = 'output window, operand 0']
    #allocation3 [shape = 's32[2]{0}', space=sflag, size = 0x8, scoped, tag = 'scoped memory for tpu_custom_call.1']
    %7 = vsyncpa [#allocation3], 0
    %s8 = scalar_lea.sflag [#allocation3], 1
    %9 = vsyncpa %s8, 0
    loop: start=0, step=1, limit=6
    $region2: #{tpu_custom_call.1} parent=1 // loop_pre_header
      _
    $region3: #{tpu_custom_call.1} parent=1 // loop_header
      %s11 = sphi 0, %s15
      %p12 = scmp.ge.s32.totalorder %s11, 6
      %s19 = sphi 0, %s19
      %s21 = sphi 0, %s19
      %s22 = sphi 0, %s21
      %s36 = sphi 0, %s22
      %s42 = sphi 0, %s44
      %s45 = sphi 0, %s42
      %s46 = sphi 0, %s45
      %s62 = sphi 0, %s46
      %s68 = sphi 0, %s70
      %s71 = sphi 0, %s68
      %s72 = sphi 0, %s71
      %s88 = sphi 0, %s72
    $region4: #{tpu_custom_call.1} parent=1 // loop_header_branch
      %14 = sbr.rel (%p12) target = $region8
    $region5: #{tpu_custom_call.1} parent=1 // loop_body
      %s16 = ssub.s32 %s11, 1
      %s17 = ssub.s32 %s11, 2
      %s18 = sadd.s32 %s11, 1
      %s20 = sadd.s32 %s19, 1
      %p23 = scmp.eq.s32.totalorder %s11, 3
      %p24 = scmp.ne.s32.totalorder %s19, %s21
      %p25 = scmp.eq.s32.totalorder %s11, 0
      %p26 = por %p24, %p25
      %p27 = scmp.ne.s32.totalorder %s19, %s21
      %p28 = scmp.eq.s32.totalorder %s16, 3
      %p29 = por %p27, %p28
      %p30 = scmp.ne.s32.totalorder %s21, %s22
      %p31 = scmp.eq.s32.totalorder %s16, 0
      %p32 = por %p30, %p31
      %p33 = scmp.ne.s32.totalorder %s21, %s22
      %p34 = scmp.eq.s32.totalorder %s17, 3
      %p35 = por %p33, %p34
      %p37 = scmp.ne.s32.totalorder %s22, %s36
      %p38 = scmp.eq.s32.totalorder %s17, 0
      %p39 = por %p37, %p38
      %s40 = ssub.s32 %s11, %s18
      %p41 = scmp.eq.s32.totalorder %s40, 0
      %s43 = sadd.s32 %s42, 1
      %s44 = scalar_select %p41, %s42, %s43
      %p47 = pneg %p41
      %p48 = scmp.eq.s32.totalorder %s11, 3
      %p49 = por %p47, %p48
      %p50 = scmp.ne.s32.totalorder %s42, %s45
      %p51 = scmp.eq.s32.totalorder %s11, 0
      %p52 = por %p50, %p51
      %p53 = scmp.ne.s32.totalorder %s42, %s45
      %p54 = scmp.eq.s32.totalorder %s16, 3
      %p55 = por %p53, %p54
      %p56 = scmp.ne.s32.totalorder %s45, %s46
      %p57 = scmp.eq.s32.totalorder %s16, 0
      %p58 = por %p56, %p57
      %p59 = scmp.ne.s32.totalorder %s45, %s46
      %p60 = scmp.eq.s32.totalorder %s17, 3
      %p61 = por %p59, %p60
      %p63 = scmp.ne.s32.totalorder %s46, %s62
      %p64 = scmp.eq.s32.totalorder %s17, 0
      %p65 = por %p63, %p64
      %s66 = ssub.s32 %s11, %s18
      %p67 = scmp.eq.s32.totalorder %s66, 0
      %s69 = sadd.s32 %s68, 1
      %s70 = scalar_select %p67, %s68, %s69
      %p73 = pneg %p67
      %p74 = scmp.eq.s32.totalorder %s11, 3
      %p75 = por %p73, %p74
      %p76 = scmp.ne.s32.totalorder %s68, %s71
      %p77 = scmp.eq.s32.totalorder %s11, 0
      %p78 = por %p76, %p77
      %p79 = scmp.ne.s32.totalorder %s68, %s71
      %p80 = scmp.eq.s32.totalorder %s16, 3
      %p81 = por %p79, %p80
      %p82 = scmp.ne.s32.totalorder %s71, %s72
      %p83 = scmp.eq.s32.totalorder %s16, 0
      %p84 = por %p82, %p83
      %p85 = scmp.ne.s32.totalorder %s71, %s72
      %p86 = scmp.eq.s32.totalorder %s17, 3
      %p87 = por %p85, %p86
      %p89 = scmp.ne.s32.totalorder %s72, %s88
      %p90 = scmp.eq.s32.totalorder %s17, 0
      %p91 = por %p89, %p90
      %p92 = scmp.le.s32.totalorder 1, %s11
      %p93 = scmp.lt.s32.totalorder %s11, 5
      %p94 = pnand %p92, %p93
      %p95 = pneg %p94
      // Predicated region
      $region9: #{tpu_custom_call.1} parent=5 // pred_check
        _
      $region10: #{tpu_custom_call.1} parent=5 // pred_check_branch
        %97 = sbr.rel (%p94) target = $region12
      $region11: #{tpu_custom_call.1} parent=5 // pred_region
        %s98 = ssub.s32 %s11, 1
        // Predicated region
        $region13: #{tpu_custom_call.1} parent=11 // pred_check
          %p99 = pneg %p32
        $region14: #{tpu_custom_call.1} parent=11 // pred_check_branch
          %101 = sbr.rel (%p99) target = $region16
        $region15: #{tpu_custom_call.1} parent=11 // pred_region
          _
        $region16: #{tpu_custom_call.1} parent=11 // pred_fallthru
          _
      $region12: #{tpu_custom_call.1} parent=5 // pred_fallthru
        _
      %p102 = scmp.lt.s32.totalorder %s11, 4
      // Predicated region
      $region17: #{tpu_custom_call.1} parent=5 // pred_check
        %p103 = pneg %p102
      $region18: #{tpu_custom_call.1} parent=5 // pred_check_branch
        %105 = sbr.rel (%p103) target = $region20
      $region19: #{tpu_custom_call.1} parent=5 // pred_region
        // Predicated region
        $region21: #{tpu_custom_call.1} parent=19 // pred_check
          %p106 = pneg %p52
        $region22: #{tpu_custom_call.1} parent=19 // pred_check_branch
          %108 = sbr.rel (%p106) target = $region24
        $region23: #{tpu_custom_call.1} parent=19 // pred_region
          %p109 = scmp.lt.s32.totalorder %s11, 3
          %s110 = scalar_select %p109, %s11, 3
          %s111 = smul.addr %s110, 7
          %s112 = smul.addr %s111, 8
          %s113 = scalar_lea.vmem %s1, %s112
        $region24: #{tpu_custom_call.1} parent=19 // pred_fallthru
          _
      $region20: #{tpu_custom_call.1} parent=5 // pred_fallthru
        _
      %p114 = scmp.le.s32.totalorder 1, %s11
      %p115 = scmp.lt.s32.totalorder %s11, 5
      %p116 = pnand %p114, %p115
      %p117 = pneg %p116
      // Predicated region
      $region25: #{tpu_custom_call.1} parent=5 // pred_check
        _
      $region26: #{tpu_custom_call.1} parent=5 // pred_check_branch
        %119 = sbr.rel (%p116) target = $region28
      $region27: #{tpu_custom_call.1} parent=5 // pred_region
        %s120 = ssub.s32 %s11, 1
        %p121 = pneg %p32
        %p122 = pneg %p29
        %p123 = scmp.lt.s32.totalorder %s16, 3
        %s124 = scalar_select %p123, %s16, 3
        %s125 = smul.addr %s124, 7
        %s126 = smul.addr %s125, 8
        %s127 = scalar_lea.vmem %s1, %s126
        %p128 = pneg %p58
        %p129 = pneg %p55
        %p130 = pneg %p84
        %p131 = pneg %p81
        %s132 = sand.u32 %s71, 1
        %s133 = scalar_lea.sflag [#allocation3], %s132
        %s134 = sand.u32 %s71, 1
        %s135 = scalar_lea.vmem [#allocation2], %s134
        %p136 = scmp.lt.s32.totalorder %s16, 3
        %s137 = scalar_select %p136, %s16, 3
        %s138 = smul.addr %s137, 7
        %s139 = smul.addr %s138, 8
        %s140 = scalar_lea.vmem %s1, %s139
        %v142 = vld [vmem:[%s0] sm:$0xf]
        %v143 = vld [vmem:[%s140] sm:$0xff]
        %v144 = vld [vmem:[%s140 + $0x8] sm:$0xff]
        %v145 = vld [vmem:[%s140 + $0x10] sm:$0xff]
        %v146 = vld [vmem:[%s140 + $0x18] sm:$0xff]
        %v147 = vld [vmem:[%s140 + $0x20] sm:$0xff]
        %v148 = vld [vmem:[%s140 + $0x28] sm:$0xff]
        %v149 = vld [vmem:[%s140 + $0x30] sm:$0xff]
        %v150 = vpack.c.bf16 %v144, %v143
        %v151 = vpack.c.bf16 %v146, %v145
        %v152 = vpack.c.bf16 %v148, %v147
        %v153 = vlaneseq
        %v154 = vshrl.u32 %v153, 7
        %v155 = vsub.s32 0, %v154
        %v156 = vrot.slane %v149, %v155
        %vm157 = vcmask 261120
        %v159 = vsel %vm157, %v142, 0
        %161 = vmatprep.subr.bf16.mxu0 0
        %162 = vmatpush1.bf16.msra.mxu0 %v150
        %163 = vmatprep.subr.bf16.mxu0 0
        %164 = vmatpush1.bf16.msra.mxu0 %v151
        %165 = vmatprep.subr.bf16.mxu0 0
        %166 = vmatpush1.bf16.msra.mxu0 0
        %167 = vmatprep.subr.bf16.mxu0 0
        %168 = vmatpush1.bf16.msra.mxu0 0
        %169 = vmatprep.subr.bf16.mxu0 0
        %170 = vmatpush1.bf16.msra.mxu0 0
        %171 = vmatprep.subr.bf16.mxu0 0
        %172 = vmatpush1.bf16.msra.mxu0 0
        %173 = vmatprep.subr.bf16.mxu0 0
        %174 = vmatpush1.bf16.msra.mxu0 0
        %175 = vmatprep.subr.bf16.mxu0 0
        %176 = vmatpush1.bf16.msra.mxu0 0
        %177 = vmatprep.subr.bf16.mxu0 0
        %178 = vmatpush1.bf16.msra.mxu0 0
        %179 = vmatprep.subr.bf16.mxu0 0
        %180 = vmatpush1.bf16.msra.mxu0 0
        %181 = vmatprep.subr.bf16.mxu0 0
        %182 = vmatpush1.bf16.msra.mxu0 0
        %183 = vmatprep.subr.bf16.mxu0 0
        %184 = vmatpush1.bf16.msra.mxu0 0
        %185 = vmatprep.subr.bf16.mxu0 0
        %186 = vmatpush1.bf16.msra.mxu0 0
        %187 = vmatprep.subr.bf16.mxu0 0
        %188 = vmatpush1.bf16.msra.mxu0 0
        %189 = vmatprep.subr.bf16.mxu0 0
        %190 = vmatpush1.bf16.msra.mxu0 0
        %191 = vmatprep.subr.bf16.mxu0 0
        %192 = vmatpush1.bf16.msra.mxu0 0
        %193 = vmatprep.mubr.bf16.mxu0 0
        %194 = vmatmul.mubr.bf16.gmra.mrb[0].mxu0 %v159
        %v195 = vpop.f32.mrb[0].mxu0
        %v196 = vadd.f32 %v156, %v195
        %v197 = vpop.f32.mrb[0].mxu0
        %v198 = vpop.f32.mrb[0].mxu0
        %v199 = vpop.f32.mrb[0].mxu0
        %200 = vdwg.mxu0
        %v201 = vmax.f32 %v196, 0.0
        %v202 = vpack.c.bf16 %v201, %v201
        %v203 = vlaneseq
        %v204 = vshrl.u32 %v203, 7
        %v205 = vsub.s32 1, %v204
        %v206 = vrot.slane %v149, %v205
        %vm207 = vcmask 130048
        %v209 = vsel %vm207, %v202, 0
        %211 = vmatprep.subr.bf16.mxu0 0
        %212 = vmatpush1.bf16.msra.mxu0 %v152
        %213 = vmatprep.subr.bf16.mxu0 0
        %214 = vmatpush1.bf16.msra.mxu0 0
        %215 = vmatprep.subr.bf16.mxu0 0
        %216 = vmatpush1.bf16.msra.mxu0 0
        %217 = vmatprep.subr.bf16.mxu0 0
        %218 = vmatpush1.bf16.msra.mxu0 0
        %219 = vmatprep.subr.bf16.mxu0 0
        %220 = vmatpush1.bf16.msra.mxu0 0
        %221 = vmatprep.subr.bf16.mxu0 0
        %222 = vmatpush1.bf16.msra.mxu0 0
        %223 = vmatprep.subr.bf16.mxu0 0
        %224 = vmatpush1.bf16.msra.mxu0 0
        %225 = vmatprep.subr.bf16.mxu0 0
        %226 = vmatpush1.bf16.msra.mxu0 0
        %227 = vmatprep.subr.bf16.mxu0 0
        %228 = vmatpush1.bf16.msra.mxu0 0
        %229 = vmatprep.subr.bf16.mxu0 0
        %230 = vmatpush1.bf16.msra.mxu0 0
        %231 = vmatprep.subr.bf16.mxu0 0
        %232 = vmatpush1.bf16.msra.mxu0 0
        %233 = vmatprep.subr.bf16.mxu0 0
        %234 = vmatpush1.bf16.msra.mxu0 0
        %235 = vmatprep.subr.bf16.mxu0 0
        %236 = vmatpush1.bf16.msra.mxu0 0
        %237 = vmatprep.subr.bf16.mxu0 0
        %238 = vmatpush1.bf16.msra.mxu0 0
        %239 = vmatprep.subr.bf16.mxu0 0
        %240 = vmatpush1.bf16.msra.mxu0 0
        %241 = vmatprep.subr.bf16.mxu0 0
        %242 = vmatpush1.bf16.msra.mxu0 0
        %243 = vmatprep.mubr.bf16.mxu0 0
        %244 = vmatmul.mubr.bf16.gmra.mrb[0].mxu0 %v209
        %v245 = vpop.f32.mrb[0].mxu0
        %v246 = vadd.f32 %v206, %v245
        %v247 = vpop.f32.mrb[0].mxu0
        %v248 = vpop.f32.mrb[0].mxu0
        %v249 = vpop.f32.mrb[0].mxu0
        %250 = vdwg.mxu0
        %v251 = vmax.f32 %v246, 0.0
        %v252 = vsel %vm207, %v251, 0.0
        %v253 = vrot.slane %v252, 4
        %v254 = vadd.f32 %v252, %v253
        %v255 = vrot.slane %v254, 2
        %v256 = vadd.f32 %v254, %v255
        %v257 = vrot.slane %v256, 1
        %v258 = vadd.f32 %v256, %v257
        %v259 = vrcp.pop 8.0
        %v260 = vmul.f32 %v258, %v259
        %v261 = vsub.f32 %v251, %v260
        %v262 = vmul.f32 %v261, %v261
        %v263 = vsel %vm207, %v262, 0.0
        %v264 = vrot.slane %v263, 4
        %v265 = vadd.f32 %v263, %v264
        %v266 = vrot.slane %v265, 2
        %v267 = vadd.f32 %v265, %v266
        %v268 = vrot.slane %v267, 1
        %v269 = vadd.f32 %v267, %v268
        %v270 = vmul.f32 %v269, %v259
        %v271 = vadd.f32 %v270, 1e-05
        %v272 = vrsqrt.pop %v271
        %v273 = vmul.f32 %v149, %v272
        %v275 = vrot.slane %v149, 2
        %v277 = vmul.f32 %v273, %v275
        %v278 = vmul.f32 %v260, %v273
        %v280 = vrot.slane %v278, 7
        %v282 = vsub.f32 %v149, %v280
        %v283 = vrot.slane %v149, 1
        %v285 = vmul.f32 %v282, %v283
        %vm286 = vcmask 125955
        %v287 = vsel %vm286, %v285, 0.0
        %288 = vadd.xlane.f32.xlu0 %v287
        %v289 = vpop.xlane.xlu0 %288
        %v290 = vadd.f32 %v289, %v275
        %292 = vset.pattern.permute.xlu0 0
        %293 = vperm.xlu0 %292, %v290
        %v294 = vpop.permute.xlu0 %293
        %v296 = vrot.slane %v277, 2
        %v297 = vrot.slane %v294, 3
        %v299 = vsel %vm207, %v296, 0
        %v302 = vsel %vm207, %v251, 0
        %304 = vmatprep.subr.mxu0 0.0
        %305 = vmatpush1.xpose.msra.mxu0 %v302
        %306 = vmatprep.subr.mxu0 0.0
        %307 = vmatpush1.xpose.msra.mxu0 0.0
        %308 = vmatprep.subr.mxu0 0.0
        %309 = vmatpush1.xpose.msra.mxu0 0.0
        %310 = vmatprep.subr.mxu0 0.0
        %311 = vmatpush1.xpose.msra.mxu0 0.0
        %312 = vmatprep.subr.mxu0 0.0
        %313 = vmatpush1.xpose.msra.mxu0 0.0
        %314 = vmatprep.subr.mxu0 0.0
        %315 = vmatpush1.xpose.msra.mxu0 0.0
        %316 = vmatprep.subr.mxu0 0.0
        %317 = vmatpush1.xpose.msra.mxu0 0.0
        %318 = vmatprep.subr.mxu0 0.0
        %319 = vmatpush1.xpose.msra.mxu0 0.0
        %320 = vmatprep.subr.mxu0 0.0
        %321 = vmatpush1.xpose.msra.mxu0 0.0
        %322 = vmatprep.subr.mxu0 0.0
        %323 = vmatpush1.xpose.msra.mxu0 0.0
        %324 = vmatprep.subr.mxu0 0.0
        %325 = vmatpush1.xpose.msra.mxu0 0.0
        %326 = vmatprep.subr.mxu0 0.0
        %327 = vmatpush1.xpose.msra.mxu0 0.0
        %328 = vmatprep.subr.mxu0 0.0
        %329 = vmatpush1.xpose.msra.mxu0 0.0
        %330 = vmatprep.subr.mxu0 0.0
        %331 = vmatpush1.xpose.msra.mxu0 0.0
        %332 = vmatprep.subr.mxu0 0.0
        %333 = vmatpush1.xpose.msra.mxu0 0.0
        %334 = vmatprep.subr.mxu0 0.0
        %335 = vmatpush1.xpose.msra.mxu0 0.0
        %336 = vmatprep.subr.mxu0 0.0
        %337 = vmatpush1.xpose.msra.mxu0 0.0
        %338 = vmatprep.subr.mxu0 0.0
        %339 = vmatpush1.xpose.msra.mxu0 0.0
        %340 = vmatprep.subr.mxu0 0.0
        %341 = vmatpush1.xpose.msra.mxu0 0.0
        %342 = vmatprep.subr.mxu0 0.0
        %343 = vmatpush1.xpose.msra.mxu0 0.0
        %344 = vmatprep.subr.mxu0 0.0
        %345 = vmatpush1.xpose.msra.mxu0 0.0
        %346 = vmatprep.subr.mxu0 0.0
        %347 = vmatpush1.xpose.msra.mxu0 0.0
        %348 = vmatprep.subr.mxu0 0.0
        %349 = vmatpush1.xpose.msra.mxu0 0.0
        %350 = vmatprep.subr.mxu0 0.0
        %351 = vmatpush1.xpose.msra.mxu0 0.0
        %352 = vmatprep.subr.mxu0 0.0
        %353 = vmatpush1.xpose.msra.mxu0 0.0
        %354 = vmatprep.subr.mxu0 0.0
        %355 = vmatpush1.xpose.msra.mxu0 0.0
        %356 = vmatprep.subr.mxu0 0.0
        %357 = vmatpush1.xpose.msra.mxu0 0.0
        %358 = vmatprep.subr.mxu0 0.0
        %359 = vmatpush1.xpose.msra.mxu0 0.0
        %360 = vmatprep.subr.mxu0 0.0
        %361 = vmatpush1.xpose.msra.mxu0 0.0
        %362 = vmatprep.subr.mxu0 0.0
        %363 = vmatpush1.xpose.msra.mxu0 0.0
        %364 = vmatprep.subr.mxu0 0.0
        %365 = vmatpush1.xpose.msra.mxu0 0.0
        %366 = vmatprep.subr.mxu0 0.0
        %367 = vmatpush1.xpose.msra.mxu0 0.0
        %368 = vmatprep.mubr.f32.mxu0 0.0
        %369 = vmatmul.mubr.f32.gmra.mrb[0].mxu0 %v299
        %v370 = vpop.f32.mrb[0].mxu0
        %v371 = vadd.f32 %v297, %v370
        %v372 = vpop.f32.mrb[0].mxu0
        %373 = vdwg.mxu0
        %v374 = vxor.u32 %v371, 2147483648
        %v375 = vmul.f32 %v374, 1.442695
        %v376 = vpow.pop %v375
        %v377 = vadd.f32 %v376, 1.0
        %v378 = vrcp.pop %v377
        %v379 = vmul.f32 1.0, %v378
        %vm380 = vcmask 57344
        %381 = vst.msk [vmem:[%s135] sm:$0x1] %vm380, %v379
        %s382 = sand.u32 %s71, 1
        %s383 = scalar_lea.sflag [#allocation3], %s382
        %s384 = sand.u32 %s71, 1
        %s385 = scalar_lea.vmem [#allocation2], %s384
        // Predicated region
        $region29: #{tpu_custom_call.1} parent=27 // pred_check
          %p386 = pneg %p81
        $region30: #{tpu_custom_call.1} parent=27 // pred_check_branch
          %388 = sbr.rel (%p386) target = $region32
        $region31: #{tpu_custom_call.1} parent=27 // pred_region
          %s390 = ssub.s32 16, 16
          %391 = vsyncadd %s383, %s390
          %s392 = smul.addr %s16, 16
          %s393 = scalar_lea.hbm %s2, %s392
          %s395 = sshll.u32 %s385, 4
          %s396 = int_to_ptr.vmem [resolvable:$true] %s395
          %398 = dma.vmem_to_hbm [thread:$0]  %s396, 16, %s393, %s383
        $region32: #{tpu_custom_call.1} parent=27 // pred_fallthru
          _
      $region28: #{tpu_custom_call.1} parent=5 // pred_fallthru
        _
      %p399 = scmp.le.s32.totalorder 2, %s11
      // Predicated region
      $region33: #{tpu_custom_call.1} parent=5 // pred_check
        %p400 = pneg %p399
      $region34: #{tpu_custom_call.1} parent=5 // pred_check_branch
        %402 = sbr.rel (%p400) target = $region36
      $region35: #{tpu_custom_call.1} parent=5 // pred_region
        %s403 = ssub.s32 %s11, 2
        // Predicated region
        $region37: #{tpu_custom_call.1} parent=35 // pred_check
          %p404 = pneg %p87
        $region38: #{tpu_custom_call.1} parent=35 // pred_check_branch
          %406 = sbr.rel (%p404) target = $region40
        $region39: #{tpu_custom_call.1} parent=35 // pred_region
          %s407 = sand.u32 %s72, 1
          %s408 = scalar_lea.sflag [#allocation3], %s407
          %s409 = sand.u32 %s72, 1
          %s410 = scalar_lea.vmem [#allocation2], %s409
          %411 = dma.done %s408, 16
        $region40: #{tpu_custom_call.1} parent=35 // pred_fallthru
          _
      $region36: #{tpu_custom_call.1} parent=5 // pred_fallthru
        _
    $region6: #{tpu_custom_call.1} parent=1 // loop_footer
      %s15 = sadd.s32 1, %s11
    $region7: #{tpu_custom_call.1} parent=1 // loop_footer_branch
      %10 = sbr.rel target = $region3
    $region8: #{tpu_custom_call.1} parent=1 // loop_exit
      _
    %412 = vsyncpa [#allocation3], 1
    %s413 = scalar_lea.sflag [#allocation3], 1
    %414 = vsyncpa %s413, 1

</llo_original>
